<compile_context>
chip_gen: v6e
topology: v6e:2x2x1
jax: 0.10.0
libtpu: 0.0.40
codegen_flags: <defaults>
</compile_context>

<pallas_src>
import jax
import jax.numpy as jnp
from jax.experimental import pallas as pl
from jax.experimental.pallas import tpu as pltpu

D_MODEL = 256   # d_model
D_FF = 64       # d_ff


def ffn_kernel(x_ref, w1_ref, b1_ref, w2_ref, b2_ref, o_ref):
    # x tile: [TM, D] in the caller's activation dtype; MXU accumulates in f32.
    h = jnp.dot(x_ref[...], w1_ref[...], preferred_element_type=jnp.float32)  # [TM, DFF]
    h = jnp.maximum(h + b1_ref[...], 0.0)          # bias + ReLU in f32 (v5e-safe epilogue)
    # TODO(synk): nn.Dropout(0.1) is identity in the eval-mode forward pass.
    y = jnp.dot(h.astype(w2_ref.dtype), w2_ref[...],
                preferred_element_type=jnp.float32)                            # [TM, D]
    o_ref[...] = (y + b2_ref[...]).astype(o_ref.dtype)


def _pick_tile_m(m):
    # Largest tile (capped at 512 for HBM-roofline efficiency) that still gives
    # the grid >= 2 steps, so the "parallel" M axis has work for both v7x TCs.
    for tm in (512, 256, 128, 64, 32, 16, 8):
        if m >= 2 * tm:
            return tm
    return 8


def positionwise_feed_forward(x, w1, b1, w2, b2):
    """x: [B, S, D] (f32 or bf16).  w1: [D, D_FF], w2: [D_FF, D]
    (i.e. nn.Linear weight transposed).  Output dtype follows x."""
    b, s, d = x.shape
    dff = w1.shape[1]
    m = b * s
    x2 = x.reshape(m, d)                          # fold batch+seq into the matmul M dim

    tm = _pick_tile_m(m)
    n_tiles = pl.cdiv(m, tm)
    m_pad = n_tiles * tm
    if m_pad != m:                                # padded tail tile; rows discarded below
        x2 = jnp.pad(x2, ((0, m_pad - m), (0, 0)))

    # Biases kept f32 so the epilogue math is exact f32 on every generation.
    b1r = b1.reshape(1, dff).astype(jnp.float32)
    b2r = b2.reshape(1, d).astype(jnp.float32)

    act_bytes = x2.dtype.itemsize
    cost = pl.CostEstimate(
        flops=4 * m_pad * d * dff,                # two matmuls, 2*M*D*DFF FLOPs each
        transcendentals=0,
        bytes_accessed=(m_pad * d * act_bytes            # x
                        + w1.size * w1.dtype.itemsize    # W1
                        + w2.size * w2.dtype.itemsize    # W2
                        + (dff + d) * 4                  # biases (f32)
                        + m_pad * d * act_bytes),        # output
    )

    out2 = pl.pallas_call(
        ffn_kernel,
        out_shape=jax.ShapeDtypeStruct((m_pad, d), x.dtype),
        grid_spec=pltpu.PrefetchScalarGridSpec(
            num_scalar_prefetch=0,
            grid=(n_tiles,),
            in_specs=[
                pl.BlockSpec((tm, d), lambda i: (i, 0)),     # x tile
                pl.BlockSpec((d, dff), lambda i: (0, 0)),    # W1 (grid-invariant)
                pl.BlockSpec((1, dff), lambda i: (0, 0)),    # b1
                pl.BlockSpec((dff, d), lambda i: (0, 0)),    # W2 (grid-invariant)
                pl.BlockSpec((1, d), lambda i: (0, 0)),      # b2
            ],
            out_specs=pl.BlockSpec((tm, d), lambda i: (i, 0)),   # lane-dense: full D cols
        ),
        compiler_params=pltpu.CompilerParams(
            dimension_semantics=("parallel",)),   # M tiles shard across TCs on v7x
        cost_estimate=cost,
    )(x2, w1, b1r, w2, b2r)

    if m_pad != m:
        out2 = out2[:m]
    return out2.reshape(b, s, d)


# ---------------- plain-JAX reference for verification ----------------
def ffn_ref(x, w1, b1, w2, b2):
    xf = x.astype(jnp.float32)
    h = jnp.maximum(jnp.einsum("bsd,df->bsf", xf, w1.astype(jnp.float32))
                    + b1.astype(jnp.float32), 0.0)
    return (jnp.einsum("bsf,fd->bsd", h, w2.astype(jnp.float32))
            + b2.astype(jnp.float32))


if __name__ == "__main__":
    key = jax.random.PRNGKey(0)
    kx, k1, kb1, k2, kb2, kx2 = jax.random.split(key, 6)

    # ---- small f32 case matching the PyTorch module defaults (B=2, S=8) ----
    B, S = 2, 8
    x = jax.random.normal(kx, (B, S, D_MODEL), jnp.float32)
    # Weights in [in, out] layout (nn.Linear weight transposed).
    w1 = jax.random.normal(k1, (D_MODEL, D_FF), jnp.float32) * 0.05
    b1 = jax.random.normal(kb1, (D_FF,), jnp.float32) * 0.05
    w2 = jax.random.normal(k2, (D_FF, D_MODEL), jnp.float32) * 0.05
    b2 = jax.random.normal(kb2, (D_MODEL,), jnp.float32) * 0.05

    out = jax.block_until_ready(positionwise_feed_forward(x, w1, b1, w2, b2))
    ref = ffn_ref(x, w1, b1, w2, b2)
    assert out.shape == (B, S, D_MODEL)
    assert jnp.allclose(out, ref, rtol=2e-2, atol=2e-2), (
        float(jnp.max(jnp.abs(out - ref))))

    # ---- larger bf16 case: M=1041 is not a tile multiple, so it exercises the
    #      padded tail, the multi-tile (512-row) grid, and the bf16 I/O path ----
    B2, S2 = 3, 347
    xb = jax.random.normal(kx2, (B2, S2, D_MODEL), jnp.float32).astype(jnp.bfloat16)
    w1b = w1.astype(jnp.bfloat16)
    w2b = w2.astype(jnp.bfloat16)
    outb = jax.block_until_ready(positionwise_feed_forward(xb, w1b, b1, w2b, b2))
    refb = ffn_ref(xb, w1b, b1, w2b, b2)
    assert outb.shape == (B2, S2, D_MODEL)
    assert jnp.allclose(outb.astype(jnp.float32), refb, rtol=5e-2, atol=5e-2), (
        float(jnp.max(jnp.abs(outb.astype(jnp.float32) - refb))))

    print("KERNEL_OK")
</pallas_src>

<mosaic_0001>
module attributes {stable_mosaic.version = 11 : i64} {
  func.func @ffn_kernel(%arg0: i32, %arg1: memref<8x256xf32, #tpu.memory_space<vmem>>, %arg2: memref<256x64xf32, #tpu.memory_space<vmem>>, %arg3: memref<1x64xf32, #tpu.memory_space<vmem>>, %arg4: memref<64x256xf32, #tpu.memory_space<vmem>>, %arg5: memref<1x256xf32, #tpu.memory_space<vmem>>, %arg6: memref<8x256xf32, #tpu.memory_space<vmem>>) attributes {dimension_semantics = [#tpu.dimension_semantics<parallel>], iteration_bounds = array<i64: 2>, scalar_prefetch = 0 : i64, scratch_operands = 0 : i64, tpu.core_type = #tpu.core_type<tc>, window_params = [{transform_indices = @transform_0, window_bounds = array<i64: 8, 256>}, {pipeline_mode = #tpu.pipeline_mode<synchronous>, transform_indices = @transform_1, window_bounds = array<i64: 256, 64>}, {pipeline_mode = #tpu.pipeline_mode<synchronous>, transform_indices = @transform_2, window_bounds = array<i64: 1, 64>}, {pipeline_mode = #tpu.pipeline_mode<synchronous>, transform_indices = @transform_3, window_bounds = array<i64: 64, 256>}, {pipeline_mode = #tpu.pipeline_mode<synchronous>, transform_indices = @transform_4, window_bounds = array<i64: 1, 256>}, {transform_indices = @transform_5, window_bounds = array<i64: 8, 256>}]} {
    %c0 = arith.constant 0 : index
    %c0_0 = arith.constant 0 : index
    %0 = vector.load %arg1[%c0, %c0_0] : memref<8x256xf32, #tpu.memory_space<vmem>>, vector<8x256xf32>
    %c0_1 = arith.constant 0 : index
    %c0_2 = arith.constant 0 : index
    %1 = vector.load %arg2[%c0_1, %c0_2] : memref<256x64xf32, #tpu.memory_space<vmem>>, vector<256x64xf32>
    %cst = arith.constant dense<0.000000e+00> : vector<8x64xf32>
    %2 = tpu.matmul %0, %1, %cst {dimension_numbers = #tpu.dot_dimension_numbers<[1], [0], [0], [1], [0, 0, 1, 1], [], []>} : vector<8x256xf32>, vector<256x64xf32>, vector<8x64xf32> -> vector<8x64xf32>
    %c0_3 = arith.constant 0 : index
    %c0_4 = arith.constant 0 : index
    %3 = vector.load %arg3[%c0_3, %c0_4] : memref<1x64xf32, #tpu.memory_space<vmem>>, vector<1x64xf32>
    %4 = vector.broadcast %3 : vector<1x64xf32> to vector<8x64xf32>
    %5 = arith.addf %2, %4 : vector<8x64xf32>
    %cst_5 = arith.constant 0.000000e+00 : f32
    %6 = vector.broadcast %cst_5 : f32 to vector<8x64xf32>
    %7 = arith.maximumf %5, %6 : vector<8x64xf32>
    %c0_6 = arith.constant 0 : index
    %c0_7 = arith.constant 0 : index
    %8 = vector.load %arg4[%c0_6, %c0_7] : memref<64x256xf32, #tpu.memory_space<vmem>>, vector<64x256xf32>
    %cst_8 = arith.constant dense<0.000000e+00> : vector<8x256xf32>
    %9 = tpu.matmul %7, %8, %cst_8 {dimension_numbers = #tpu.dot_dimension_numbers<[1], [0], [0], [1], [0, 0, 1, 1], [], []>} : vector<8x64xf32>, vector<64x256xf32>, vector<8x256xf32> -> vector<8x256xf32>
    %c0_9 = arith.constant 0 : index
    %c0_10 = arith.constant 0 : index
    %10 = vector.load %arg5[%c0_9, %c0_10] : memref<1x256xf32, #tpu.memory_space<vmem>>, vector<1x256xf32>
    %11 = vector.broadcast %10 : vector<1x256xf32> to vector<8x256xf32>
    %12 = arith.addf %9, %11 : vector<8x256xf32>
    %c0_11 = arith.constant 0 : index
    %c0_12 = arith.constant 0 : index
    %13 = vector.load %arg6[%c0_11, %c0_12] : memref<8x256xf32, #tpu.memory_space<vmem>>, vector<8x256xf32>
    tpu.vector_store %arg6[%c0_11, %c0_12], %12 {strides = array<i32>} : memref<8x256xf32, #tpu.memory_space<vmem>>, vector<8x256xf32>,
    return
  }
  func.func @transform_0(%arg0: i32) -> (i32, i32) {
    %c0_i32 = arith.constant 0 : i32
    %c0_i32_0 = arith.constant 0 : i32
    return %arg0, %c0_i32 : i32, i32
  }
  func.func @transform_1(%arg0: i32) -> (i32, i32) {
    %c0_i32 = arith.constant 0 : i32
    %c0_i32_0 = arith.constant 0 : i32
    %c0_i32_1 = arith.constant 0 : i32
    return %c0_i32, %c0_i32_0 : i32, i32
  }
  func.func @transform_2(%arg0: i32) -> (i32, i32) {
    %c0_i32 = arith.constant 0 : i32
    %c0_i32_0 = arith.constant 0 : i32
    %c0_i32_1 = arith.constant 0 : i32
    return %c0_i32, %c0_i32_0 : i32, i32
  }
  func.func @transform_3(%arg0: i32) -> (i32, i32) {
    %c0_i32 = arith.constant 0 : i32
    %c0_i32_0 = arith.constant 0 : i32
    %c0_i32_1 = arith.constant 0 : i32
    return %c0_i32, %c0_i32_0 : i32, i32
  }
  func.func @transform_4(%arg0: i32) -> (i32, i32) {
    %c0_i32 = arith.constant 0 : i32
    %c0_i32_0 = arith.constant 0 : i32
    %c0_i32_1 = arith.constant 0 : i32
    return %c0_i32, %c0_i32_0 : i32, i32
  }
  func.func @transform_5(%arg0: i32) -> (i32, i32) {
    %c0_i32 = arith.constant 0 : i32
    %c0_i32_0 = arith.constant 0 : i32
    return %arg0, %c0_i32 : i32, i32
  }
}

</mosaic_0001>

<llo_original>
// kernel: tpu_custom_call.1
$region0: #{tpu_custom_call.1}
  #allocation0 [shape = 'u32[]', space=smem, size = 0x4, offset = 0x4, fixed_abs, tag = 'smem constant byte address 0x4 - core index']
  #allocation1 [shape = 'u32[144,128]{1,0:T(1,128)}', space=vmem, size = 0x12000, scoped, tag = 'internal scratch']
  %s0 = inlined_call_operand.vmem [shape: f32[16,256], index: 0, kind: input, shape index: {}]
  %s1 = inlined_call_operand.vmem [shape: f32[256,64], index: 1, kind: input, shape index: {}]
  %s2 = inlined_call_operand.vmem [shape: f32[1,64], index: 2, kind: input, shape index: {}]
  %s3 = inlined_call_operand.vmem [shape: f32[64,256], index: 3, kind: input, shape index: {}]
  %s4 = inlined_call_operand.vmem [shape: f32[1,256], index: 4, kind: input, shape index: {}]
  %s5 = inlined_call_operand.hbm [shape: f32[16,256], index: 5, kind: output, shape index: {}]
  %s6 = sld [smem:[#allocation0]]
  $region53: #{tpu_custom_call.1} parent=0
    _
  %s8 = ssub.s32 1, %s6
  %s9 = scalar_select 0, %s8, %s6
  $region1: #{tpu_custom_call.1} parent=0
    #allocation2 [shape = 'u8[16384]{0}', space=vmem, size = 0x4000, scoped, tag = 'output window, operand 0']
    #allocation3 [shape = 's32[2]{0}', space=sflag, size = 0x8, scoped, tag = 'scoped memory for tpu_custom_call.1']
    %10 = vsyncpa [#allocation3], 0
    %s11 = scalar_lea.sflag [#allocation3], 1
    %12 = vsyncpa %s11, 0
    loop: start=0, step=1, limit=4
    $region2: #{tpu_custom_call.1} parent=1 // loop_pre_header
      _
    $region3: #{tpu_custom_call.1} parent=1 // loop_header
      %s14 = sphi 0, %s18
      %p15 = scmp.ge.s32.totalorder %s14, 4
      %s24 = sphi 0, %s26
      %s27 = sphi 0, %s24
      %s28 = sphi 0, %s27
      %s44 = sphi 0, %s28
      %s48 = sphi 0, %s48
      %s50 = sphi 0, %s48
      %s51 = sphi 0, %s50
      %s65 = sphi 0, %s51
      %s69 = sphi 0, %s69
      %s71 = sphi 0, %s69
      %s72 = sphi 0, %s71
      %s86 = sphi 0, %s72
      %s90 = sphi 0, %s90
      %s92 = sphi 0, %s90
      %s93 = sphi 0, %s92
      %s107 = sphi 0, %s93
      %s111 = sphi 0, %s111
      %s113 = sphi 0, %s111
      %s114 = sphi 0, %s113
      %s128 = sphi 0, %s114
      %s134 = sphi 0, %s136
      %s137 = sphi 0, %s134
      %s138 = sphi 0, %s137
      %s154 = sphi 0, %s138
    $region4: #{tpu_custom_call.1} parent=1 // loop_header_branch
      %17 = sbr.rel (%p15) target = $region8
    $region5: #{tpu_custom_call.1} parent=1 // loop_body
      %s19 = ssub.s32 %s14, 1
      %s20 = ssub.s32 %s14, 2
      %s21 = sadd.s32 %s14, 1
      %s22 = ssub.s32 %s14, %s21
      %p23 = scmp.eq.s32.totalorder %s22, 0
      %s25 = sadd.s32 %s24, 1
      %s26 = scalar_select %p23, %s24, %s25
      %p29 = pneg %p23
      %p30 = scmp.eq.s32.totalorder %s14, 1
      %p31 = por %p29, %p30
      %p32 = scmp.ne.s32.totalorder %s24, %s27
      %p33 = scmp.eq.s32.totalorder %s14, 0
      %p34 = por %p32, %p33
      %p35 = scmp.ne.s32.totalorder %s24, %s27
      %p36 = scmp.eq.s32.totalorder %s19, 1
      %p37 = por %p35, %p36
      %p38 = scmp.ne.s32.totalorder %s27, %s28
      %p39 = scmp.eq.s32.totalorder %s19, 0
      %p40 = por %p38, %p39
      %p41 = scmp.ne.s32.totalorder %s27, %s28
      %p42 = scmp.eq.s32.totalorder %s20, 1
      %p43 = por %p41, %p42
      %p45 = scmp.ne.s32.totalorder %s28, %s44
      %p46 = scmp.eq.s32.totalorder %s20, 0
      %p47 = por %p45, %p46
      %s49 = sadd.s32 %s48, 1
      %p52 = scmp.eq.s32.totalorder %s14, 1
      %p53 = scmp.ne.s32.totalorder %s48, %s50
      %p54 = scmp.eq.s32.totalorder %s14, 0
      %p55 = por %p53, %p54
      %p56 = scmp.ne.s32.totalorder %s48, %s50
      %p57 = scmp.eq.s32.totalorder %s19, 1
      %p58 = por %p56, %p57
      %p59 = scmp.ne.s32.totalorder %s50, %s51
      %p60 = scmp.eq.s32.totalorder %s19, 0
      %p61 = por %p59, %p60
      %p62 = scmp.ne.s32.totalorder %s50, %s51
      %p63 = scmp.eq.s32.totalorder %s20, 1
      %p64 = por %p62, %p63
      %p66 = scmp.ne.s32.totalorder %s51, %s65
      %p67 = scmp.eq.s32.totalorder %s20, 0
      %p68 = por %p66, %p67
      %s70 = sadd.s32 %s69, 1
      %p73 = scmp.eq.s32.totalorder %s14, 1
      %p74 = scmp.ne.s32.totalorder %s69, %s71
      %p75 = scmp.eq.s32.totalorder %s14, 0
      %p76 = por %p74, %p75
      %p77 = scmp.ne.s32.totalorder %s69, %s71
      %p78 = scmp.eq.s32.totalorder %s19, 1
      %p79 = por %p77, %p78
      %p80 = scmp.ne.s32.totalorder %s71, %s72
      %p81 = scmp.eq.s32.totalorder %s19, 0
      %p82 = por %p80, %p81
      %p83 = scmp.ne.s32.totalorder %s71, %s72
      %p84 = scmp.eq.s32.totalorder %s20, 1
      %p85 = por %p83, %p84
      %p87 = scmp.ne.s32.totalorder %s72, %s86
      %p88 = scmp.eq.s32.totalorder %s20, 0
      %p89 = por %p87, %p88
      %s91 = sadd.s32 %s90, 1
      %p94 = scmp.eq.s32.totalorder %s14, 1
      %p95 = scmp.ne.s32.totalorder %s90, %s92
      %p96 = scmp.eq.s32.totalorder %s14, 0
      %p97 = por %p95, %p96
      %p98 = scmp.ne.s32.totalorder %s90, %s92
      %p99 = scmp.eq.s32.totalorder %s19, 1
      %p100 = por %p98, %p99
      %p101 = scmp.ne.s32.totalorder %s92, %s93
      %p102 = scmp.eq.s32.totalorder %s19, 0
      %p103 = por %p101, %p102
      %p104 = scmp.ne.s32.totalorder %s92, %s93
      %p105 = scmp.eq.s32.totalorder %s20, 1
      %p106 = por %p104, %p105
      %p108 = scmp.ne.s32.totalorder %s93, %s107
      %p109 = scmp.eq.s32.totalorder %s20, 0
      %p110 = por %p108, %p109
      %s112 = sadd.s32 %s111, 1
      %p115 = scmp.eq.s32.totalorder %s14, 1
      %p116 = scmp.ne.s32.totalorder %s111, %s113
      %p117 = scmp.eq.s32.totalorder %s14, 0
      %p118 = por %p116, %p117
      %p119 = scmp.ne.s32.totalorder %s111, %s113
      %p120 = scmp.eq.s32.totalorder %s19, 1
      %p121 = por %p119, %p120
      %p122 = scmp.ne.s32.totalorder %s113, %s114
      %p123 = scmp.eq.s32.totalorder %s19, 0
      %p124 = por %p122, %p123
      %p125 = scmp.ne.s32.totalorder %s113, %s114
      %p126 = scmp.eq.s32.totalorder %s20, 1
      %p127 = por %p125, %p126
      %p129 = scmp.ne.s32.totalorder %s114, %s128
      %p130 = scmp.eq.s32.totalorder %s20, 0
      %p131 = por %p129, %p130
      %s132 = ssub.s32 %s14, %s21
      %p133 = scmp.eq.s32.totalorder %s132, 0
      %s135 = sadd.s32 %s134, 1
      %s136 = scalar_select %p133, %s134, %s135
      %p139 = pneg %p133
      %p140 = scmp.eq.s32.totalorder %s14, 1
      %p141 = por %p139, %p140
      %p142 = scmp.ne.s32.totalorder %s134, %s137
      %p143 = scmp.eq.s32.totalorder %s14, 0
      %p144 = por %p142, %p143
      %p145 = scmp.ne.s32.totalorder %s134, %s137
      %p146 = scmp.eq.s32.totalorder %s19, 1
      %p147 = por %p145, %p146
      %p148 = scmp.ne.s32.totalorder %s137, %s138
      %p149 = scmp.eq.s32.totalorder %s19, 0
      %p150 = por %p148, %p149
      %p151 = scmp.ne.s32.totalorder %s137, %s138
      %p152 = scmp.eq.s32.totalorder %s20, 1
      %p153 = por %p151, %p152
      %p155 = scmp.ne.s32.totalorder %s138, %s154
      %p156 = scmp.eq.s32.totalorder %s20, 0
      %p157 = por %p155, %p156
      %p158 = scmp.le.s32.totalorder 1, %s14
      %p159 = scmp.lt.s32.totalorder %s14, 3
      %p160 = pnand %p158, %p159
      %p161 = pneg %p160
      // Predicated region
      $region9: #{tpu_custom_call.1} parent=5 // pred_check
        _
      $region10: #{tpu_custom_call.1} parent=5 // pred_check_branch
        %163 = sbr.rel (%p160) target = $region12
      $region11: #{tpu_custom_call.1} parent=5 // pred_region
        %s164 = ssub.s32 %s14, 1
        // Predicated region
        $region13: #{tpu_custom_call.1} parent=11 // pred_check
          %p165 = pneg %p61
        $region14: #{tpu_custom_call.1} parent=11 // pred_check_branch
          %167 = sbr.rel (%p165) target = $region16
        $region15: #{tpu_custom_call.1} parent=11 // pred_region
          _
        $region16: #{tpu_custom_call.1} parent=11 // pred_fallthru
          _
        // Predicated region
        $region17: #{tpu_custom_call.1} parent=11 // pred_check
          %p168 = pneg %p82
        $region18: #{tpu_custom_call.1} parent=11 // pred_check_branch
          %170 = sbr.rel (%p168) target = $region20
        $region19: #{tpu_custom_call.1} parent=11 // pred_region
          _
        $region20: #{tpu_custom_call.1} parent=11 // pred_fallthru
          _
        // Predicated region
        $region21: #{tpu_custom_call.1} parent=11 // pred_check
          %p171 = pneg %p103
        $region22: #{tpu_custom_call.1} parent=11 // pred_check_branch
          %173 = sbr.rel (%p171) target = $region24
        $region23: #{tpu_custom_call.1} parent=11 // pred_region
          _
        $region24: #{tpu_custom_call.1} parent=11 // pred_fallthru
          _
        // Predicated region
        $region25: #{tpu_custom_call.1} parent=11 // pred_check
          %p174 = pneg %p124
        $region26: #{tpu_custom_call.1} parent=11 // pred_check_branch
          %176 = sbr.rel (%p174) target = $region28
        $region27: #{tpu_custom_call.1} parent=11 // pred_region
          _
        $region28: #{tpu_custom_call.1} parent=11 // pred_fallthru
          _
      $region12: #{tpu_custom_call.1} parent=5 // pred_fallthru
        _
      %p177 = scmp.lt.s32.totalorder %s14, 2
      // Predicated region
      $region29: #{tpu_custom_call.1} parent=5 // pred_check
        %p178 = pneg %p177
      $region30: #{tpu_custom_call.1} parent=5 // pred_check_branch
        %180 = sbr.rel (%p178) target = $region32
      $region31: #{tpu_custom_call.1} parent=5 // pred_region
        // Predicated region
        $region33: #{tpu_custom_call.1} parent=31 // pred_check
          %p181 = pneg %p34
        $region34: #{tpu_custom_call.1} parent=31 // pred_check_branch
          %183 = sbr.rel (%p181) target = $region36
        $region35: #{tpu_custom_call.1} parent=31 // pred_region
          %p184 = scmp.lt.s32.totalorder %s14, 1
          %s185 = scalar_select %p184, %s14, 1
          %s186 = smul.addr %s185, 2
          %s187 = smul.addr %s186, 8
          %s188 = scalar_lea.vmem %s0, %s187
        $region36: #{tpu_custom_call.1} parent=31 // pred_fallthru
          _
      $region32: #{tpu_custom_call.1} parent=5 // pred_fallthru
        _
      %p189 = scmp.le.s32.totalorder 1, %s14
      %p190 = scmp.lt.s32.totalorder %s14, 3
      %p191 = pnand %p189, %p190
      %p192 = pneg %p191
      // Predicated region
      $region37: #{tpu_custom_call.1} parent=5 // pred_check
        _
      $region38: #{tpu_custom_call.1} parent=5 // pred_check_branch
        %194 = sbr.rel (%p191) target = $region40
      $region39: #{tpu_custom_call.1} parent=5 // pred_region
        %s195 = ssub.s32 %s14, 1
        %p196 = scmp.lt.s32.totalorder %s19, 1
        %s197 = scalar_select %p196, %s19, 1
        %s198 = smul.addr %s197, 2
        %s199 = smul.addr %s198, 8
        %s200 = scalar_lea.vmem %s0, %s199
        %p201 = pneg %p40
        %p202 = pneg %p37
        %p203 = pneg %p61
        %p204 = pneg %p58
        %p205 = pneg %p82
        %p206 = pneg %p79
        %p207 = pneg %p103
        %p208 = pneg %p100
        %p209 = pneg %p124
        %p210 = pneg %p121
        %p211 = pneg %p150
        %p212 = pneg %p147
        %s213 = sand.u32 %s137, 1
        %s214 = scalar_lea.sflag [#allocation3], %s213
        %s215 = sand.u32 %s137, 1
        %s216 = smul.addr %s215, 16
        %s217 = scalar_lea.vmem [#allocation2], %s216
        %p218 = scmp.lt.s32.totalorder %s19, 1
        %s219 = scalar_select %p218, %s19, 1
        %s220 = smul.addr %s219, 2
        %s221 = smul.addr %s220, 8
        %s222 = scalar_lea.vmem %s0, %s221
        %v223 = vld [vmem:[%s222] sm:$0xff]
        %v224 = vld [vmem:[%s222 + $0x8] sm:$0xff]
        %v225 = vld [vmem:[%s1] sm:$0xff]
        %v226 = vld [vmem:[%s1 + $0x8] sm:$0xff]
        %v227 = vld [vmem:[%s1 + $0x10] sm:$0xff]
        %v228 = vld [vmem:[%s1 + $0x18] sm:$0xff]
        %v229 = vld [vmem:[%s1 + $0x20] sm:$0xff]
        %v230 = vld [vmem:[%s1 + $0x28] sm:$0xff]
        %v231 = vld [vmem:[%s1 + $0x30] sm:$0xff]
        %v232 = vld [vmem:[%s1 + $0x38] sm:$0xff]
        %v233 = vld [vmem:[%s1 + $0x40] sm:$0xff]
        %v234 = vld [vmem:[%s1 + $0x48] sm:$0xff]
        %v235 = vld [vmem:[%s1 + $0x50] sm:$0xff]
        %v236 = vld [vmem:[%s1 + $0x58] sm:$0xff]
        %v237 = vld [vmem:[%s1 + $0x60] sm:$0xff]
        %v238 = vld [vmem:[%s1 + $0x68] sm:$0xff]
        %v239 = vld [vmem:[%s1 + $0x70] sm:$0xff]
        %v240 = vld [vmem:[%s1 + $0x78] sm:$0xff]
        %v241 = vld [vmem:[%s1 + $0x80] sm:$0xff]
        %v242 = vld [vmem:[%s1 + $0x88] sm:$0xff]
        %v243 = vld [vmem:[%s1 + $0x90] sm:$0xff]
        %v244 = vld [vmem:[%s1 + $0x98] sm:$0xff]
        %v245 = vld [vmem:[%s1 + $0xa0] sm:$0xff]
        %v246 = vld [vmem:[%s1 + $0xa8] sm:$0xff]
        %v247 = vld [vmem:[%s1 + $0xb0] sm:$0xff]
        %v248 = vld [vmem:[%s1 + $0xb8] sm:$0xff]
        %v249 = vld [vmem:[%s1 + $0xc0] sm:$0xff]
        %v250 = vld [vmem:[%s1 + $0xc8] sm:$0xff]
        %v251 = vld [vmem:[%s1 + $0xd0] sm:$0xff]
        %v252 = vld [vmem:[%s1 + $0xd8] sm:$0xff]
        %v253 = vld [vmem:[%s1 + $0xe0] sm:$0xff]
        %v254 = vld [vmem:[%s1 + $0xe8] sm:$0xff]
        %v255 = vld [vmem:[%s1 + $0xf0] sm:$0xff]
        %v256 = vld [vmem:[%s1 + $0xf8] sm:$0xff]
        %v257 = vld [vmem:[%s2] sm:$0x1]
        %v259 = vlaneseq
        %v260 = vshrl.u32 %v259, 7
        %v261 = vsub.s32 0, %v260
        %v262 = vrot.slane %v257, %v261
        %264 = vmatprep.subr.mxu0 0.0
        %265 = vmatpush1.msra.mxu0 %v240
        %266 = vmatprep.subr.mxu0 0.0
        %267 = vmatpush1.msra.mxu0 %v239
        %268 = vmatprep.subr.mxu0 0.0
        %269 = vmatpush1.msra.mxu0 %v238
        %270 = vmatprep.subr.mxu0 0.0
        %271 = vmatpush1.msra.mxu0 %v237
        %272 = vmatprep.subr.mxu0 0.0
        %273 = vmatpush1.msra.mxu0 %v236
        %274 = vmatprep.subr.mxu0 0.0
        %275 = vmatpush1.msra.mxu0 %v235
        %276 = vmatprep.subr.mxu0 0.0
        %277 = vmatpush1.msra.mxu0 %v234
        %278 = vmatprep.subr.mxu0 0.0
        %279 = vmatpush1.msra.mxu0 %v233
        %280 = vmatprep.subr.mxu0 0.0
        %281 = vmatpush1.msra.mxu0 %v232
        %282 = vmatprep.subr.mxu0 0.0
        %283 = vmatpush1.msra.mxu0 %v231
        %284 = vmatprep.subr.mxu0 0.0
        %285 = vmatpush1.msra.mxu0 %v230
        %286 = vmatprep.subr.mxu0 0.0
        %287 = vmatpush1.msra.mxu0 %v229
        %288 = vmatprep.subr.mxu0 0.0
        %289 = vmatpush1.msra.mxu0 %v228
        %290 = vmatprep.subr.mxu0 0.0
        %291 = vmatpush1.msra.mxu0 %v227
        %292 = vmatprep.subr.mxu0 0.0
        %293 = vmatpush1.msra.mxu0 %v226
        %294 = vmatprep.subr.mxu0 0.0
        %295 = vmatpush1.msra.mxu0 %v225
        %296 = vmatprep.subr.mxu0 0.0
        %297 = vmatpush2.msra.mxu0 %v256
        %298 = vmatprep.subr.mxu0 0.0
        %299 = vmatpush2.msra.mxu0 %v255
        %300 = vmatprep.subr.mxu0 0.0
        %301 = vmatpush2.msra.mxu0 %v254
        %302 = vmatprep.subr.mxu0 0.0
        %303 = vmatpush2.msra.mxu0 %v253
        %304 = vmatprep.subr.mxu0 0.0
        %305 = vmatpush2.msra.mxu0 %v252
        %306 = vmatprep.subr.mxu0 0.0
        %307 = vmatpush2.msra.mxu0 %v251
        %308 = vmatprep.subr.mxu0 0.0
        %309 = vmatpush2.msra.mxu0 %v250
        %310 = vmatprep.subr.mxu0 0.0
        %311 = vmatpush2.msra.mxu0 %v249
        %312 = vmatprep.subr.mxu0 0.0
        %313 = vmatpush2.msra.mxu0 %v248
        %314 = vmatprep.subr.mxu0 0.0
        %315 = vmatpush2.msra.mxu0 %v247
        %316 = vmatprep.subr.mxu0 0.0
        %317 = vmatpush2.msra.mxu0 %v246
        %318 = vmatprep.subr.mxu0 0.0
        %319 = vmatpush2.msra.mxu0 %v245
        %320 = vmatprep.subr.mxu0 0.0
        %321 = vmatpush2.msra.mxu0 %v244
        %322 = vmatprep.subr.mxu0 0.0
        %323 = vmatpush2.msra.mxu0 %v243
        %324 = vmatprep.subr.mxu0 0.0
        %325 = vmatpush2.msra.mxu0 %v242
        %326 = vmatprep.subr.mxu0 0.0
        %327 = vmatpush2.msra.mxu0 %v241
        %328 = vmatprep.mubr.f32.mxu0 %v224
        %329 = vmatmul.mubr.f32.gmra.mxu0 %v223
        %v330 = vpop.f32.mrf.mxu0
        %v331 = vadd.f32 %v262, %v330
        %v332 = vpop.f32.mrf.mxu0
        %333 = vdwg.mxu0
        %v334 = vmax.f32 %v331, 0.0
        %v335 = vld [vmem:[%s3] sm:$0xff]
        %v336 = vld [vmem:[%s3 + $0x8] sm:$0xff]
        %v337 = vld [vmem:[%s3 + $0x10] sm:$0xff]
        %v338 = vld [vmem:[%s3 + $0x18] sm:$0xff]
        %v339 = vld [vmem:[%s3 + $0x20] sm:$0xff]
        %v340 = vld [vmem:[%s3 + $0x28] sm:$0xff]
        %v341 = vld [vmem:[%s3 + $0x30] sm:$0xff]
        %v342 = vld [vmem:[%s3 + $0x38] sm:$0xff]
        %v343 = vld [vmem:[%s3 + $0x40] sm:$0xff]
        %v344 = vld [vmem:[%s3 + $0x48] sm:$0xff]
        %v345 = vld [vmem:[%s3 + $0x50] sm:$0xff]
        %v346 = vld [vmem:[%s3 + $0x58] sm:$0xff]
        %v347 = vld [vmem:[%s3 + $0x60] sm:$0xff]
        %v348 = vld [vmem:[%s3 + $0x68] sm:$0xff]
        %v349 = vld [vmem:[%s3 + $0x70] sm:$0xff]
        %v350 = vld [vmem:[%s3 + $0x78] sm:$0xff]
        %v351 = vld [vmem:[%s4] sm:$0x3]
        %v353 = vlaneseq
        %v354 = vshrl.u32 %v353, 7
        %v355 = vsub.s32 0, %v354
        %v356 = vrot.slane %v351, %v355
        %v357 = vlaneseq
        %v358 = vshrl.u32 %v357, 7
        %v359 = vsub.s32 1, %v358
        %v360 = vrot.slane %v351, %v359
        %vm363 = vcmask 523264
        %v365 = vsel %vm363, %v334, 0
        %367 = vmatprep.subr.mxu0 0.0
        %368 = vmatpush1.msra.mxu0 0.0
        %369 = vmatprep.subr.mxu0 0.0
        %370 = vmatpush1.msra.mxu0 0.0
        %371 = vmatprep.subr.mxu0 0.0
        %372 = vmatpush1.msra.mxu0 0.0
        %373 = vmatprep.subr.mxu0 0.0
        %374 = vmatpush1.msra.mxu0 0.0
        %375 = vmatprep.subr.mxu0 0.0
        %376 = vmatpush1.msra.mxu0 0.0
        %377 = vmatprep.subr.mxu0 0.0
        %378 = vmatpush1.msra.mxu0 0.0
        %379 = vmatprep.subr.mxu0 0.0
        %380 = vmatpush1.msra.mxu0 0.0
        %381 = vmatprep.subr.mxu0 0.0
        %382 = vmatpush1.msra.mxu0 0.0
        %383 = vmatprep.subr.mxu0 %v350
        %384 = vmatpush1.msra.mxu0 %v349
        %385 = vmatprep.subr.mxu0 %v348
        %386 = vmatpush1.msra.mxu0 %v347
        %387 = vmatprep.subr.mxu0 %v346
        %388 = vmatpush1.msra.mxu0 %v345
        %389 = vmatprep.subr.mxu0 %v344
        %390 = vmatpush1.msra.mxu0 %v343
        %391 = vmatprep.subr.mxu0 %v342
        %392 = vmatpush1.msra.mxu0 %v341
        %393 = vmatprep.subr.mxu0 %v340
        %394 = vmatpush1.msra.mxu0 %v339
        %395 = vmatprep.subr.mxu0 %v338
        %396 = vmatpush1.msra.mxu0 %v337
        %397 = vmatprep.subr.mxu0 %v336
        %398 = vmatpush1.msra.mxu0 %v335
        %399 = vmatprep.subr.mxu0 0.0
        %400 = vmatpush2.msra.mxu0 0.0
        %401 = vmatprep.subr.mxu0 0.0
        %402 = vmatpush2.msra.mxu0 0.0
        %403 = vmatprep.subr.mxu0 0.0
        %404 = vmatpush2.msra.mxu0 0.0
        %405 = vmatprep.subr.mxu0 0.0
        %406 = vmatpush2.msra.mxu0 0.0
        %407 = vmatprep.subr.mxu0 0.0
        %408 = vmatpush2.msra.mxu0 0.0
        %409 = vmatprep.subr.mxu0 0.0
        %410 = vmatpush2.msra.mxu0 0.0
        %411 = vmatprep.subr.mxu0 0.0
        %412 = vmatpush2.msra.mxu0 0.0
        %413 = vmatprep.subr.mxu0 0.0
        %414 = vmatpush2.msra.mxu0 0.0
        %415 = vmatprep.subr.mxu0 0.0
        %416 = vmatpush2.msra.mxu0 0.0
        %417 = vmatprep.subr.mxu0 0.0
        %418 = vmatpush2.msra.mxu0 0.0
        %419 = vmatprep.subr.mxu0 0.0
        %420 = vmatpush2.msra.mxu0 0.0
        %421 = vmatprep.subr.mxu0 0.0
        %422 = vmatpush2.msra.mxu0 0.0
        %423 = vmatprep.subr.mxu0 0.0
        %424 = vmatpush2.msra.mxu0 0.0
        %425 = vmatprep.subr.mxu0 0.0
        %426 = vmatpush2.msra.mxu0 0.0
        %427 = vmatprep.subr.mxu0 0.0
        %428 = vmatpush2.msra.mxu0 0.0
        %429 = vmatprep.subr.mxu0 0.0
        %430 = vmatpush2.msra.mxu0 0.0
        %431 = vmatprep.mubr.f32.mxu0 0.0
        %432 = vmatmul.mubr.f32.gmra.mxu0 %v365
        %v433 = vpop.f32.mrf.mxu0
        %v434 = vadd.f32 %v356, %v433
        %v435 = vpop.f32.mrf.mxu0
        %v436 = vadd.f32 %v360, %v435
        %437 = vdwg.mxu0
        %438 = vst [vmem:[%s217] sm:$0xff] %v434
        %439 = vst [vmem:[%s217 + $0x8] sm:$0xff] %v436
        %s440 = sand.u32 %s137, 1
        %s441 = scalar_lea.sflag [#allocation3], %s440
        %s442 = sand.u32 %s137, 1
        %s443 = smul.addr %s442, 16
        %s444 = scalar_lea.vmem [#allocation2], %s443
        // Predicated region
        $region41: #{tpu_custom_call.1} parent=39 // pred_check
          %p445 = pneg %p147
        $region42: #{tpu_custom_call.1} parent=39 // pred_check_branch
          %447 = sbr.rel (%p445) target = $region44
        $region43: #{tpu_custom_call.1} parent=39 // pred_region
          %s449 = ssub.s32 256, 256
          %450 = vsyncadd %s441, %s449
          %s451 = smul.addr %s19, 2
          %s452 = smul.addr %s451, 128
          %s453 = scalar_lea.hbm %s5, %s452
          %s455 = sshll.u32 %s444, 4
          %s456 = int_to_ptr.vmem [resolvable:$true] %s455
          %458 = dma.vmem_to_hbm [thread:$0]  %s456, 256, %s453, %s441
        $region44: #{tpu_custom_call.1} parent=39 // pred_fallthru
          _
      $region40: #{tpu_custom_call.1} parent=5 // pred_fallthru
        _
      %p459 = scmp.le.s32.totalorder 2, %s14
      // Predicated region
      $region45: #{tpu_custom_call.1} parent=5 // pred_check
        %p460 = pneg %p459
      $region46: #{tpu_custom_call.1} parent=5 // pred_check_branch
        %462 = sbr.rel (%p460) target = $region48
      $region47: #{tpu_custom_call.1} parent=5 // pred_region
        %s463 = ssub.s32 %s14, 2
        // Predicated region
        $region49: #{tpu_custom_call.1} parent=47 // pred_check
          %p464 = pneg %p153
        $region50: #{tpu_custom_call.1} parent=47 // pred_check_branch
          %466 = sbr.rel (%p464) target = $region52
        $region51: #{tpu_custom_call.1} parent=47 // pred_region
          %s467 = sand.u32 %s138, 1
          %s468 = scalar_lea.sflag [#allocation3], %s467
          %s469 = sand.u32 %s138, 1
          %s470 = smul.addr %s469, 16
          %s471 = scalar_lea.vmem [#allocation2], %s470
          %472 = dma.done %s468, 256
        $region52: #{tpu_custom_call.1} parent=47 // pred_fallthru
          _
      $region48: #{tpu_custom_call.1} parent=5 // pred_fallthru
        _
    $region6: #{tpu_custom_call.1} parent=1 // loop_footer
      %s18 = sadd.s32 1, %s14
    $region7: #{tpu_custom_call.1} parent=1 // loop_footer_branch
      %13 = sbr.rel target = $region3
    $region8: #{tpu_custom_call.1} parent=1 // loop_exit
      _
    %473 = vsyncpa [#allocation3], 1
    %s474 = scalar_lea.sflag [#allocation3], 1
    %475 = vsyncpa %s474, 1

</llo_original>
